<compile_context>
chip_gen: v7x
topology: tpu7x:2x2x1
jax: 0.10.0
libtpu: 0.0.40
codegen_flags: <defaults>
</compile_context>

<pallas_src>
import math
import functools

import jax
import jax.numpy as jnp
from jax import lax
from jax.experimental import pallas as pl
from jax.experimental.pallas import tpu as pltpu


def _round_up(x, n):
    return ((x + n - 1) // n) * n


def _class_tiling(num_classes, block_c):
    ct = min(block_c, _round_up(num_classes, 128))   # lane-dense class tile
    c_pad = _round_up(num_classes, ct)
    return ct, c_pad


def prepare_arcface_weight(weight, *, block_c=1024, eps=1e-12):
    """One-time weight preprocessing (hoisted out of the per-call path).

    - L2-normalize rows in f32 (folds 1/||w_c|| into the weight itself),
    - transpose to (E, C) so the kernel matmul is a plain NN (Bt,E)x(E,Ct),
    - cast to bf16 (halves streamed HBM bytes, feeds the bf16-native MXU),
    - pad the class dim to a multiple of the class tile (padded columns are zero
      -> cosine 0 there; they are sliced off after the kernel).
    """
    C, E = weight.shape
    _, c_pad = _class_tiling(C, block_c)
    w = weight.astype(jnp.float32)
    w_n = w * lax.rsqrt(jnp.maximum(jnp.sum(w * w, axis=-1, keepdims=True), eps * eps))
    w_t = w_n.T.astype(jnp.bfloat16)                 # (E, C)
    if c_pad != C:
        w_t = jnp.pad(w_t, ((0, 0), (0, c_pad - C)))
    return w_t


def _arcface_kernel(emb_ref, w_ref, tgt_ref, out_ref, *, cos_m, sin_m, scale):
    j = pl.program_id(0)                             # class-tile index (outer grid axis)

    # (Bt, E) bf16 x (E, Ct) bf16 -> (Bt, Ct) f32 on the MXU.  Both operands are
    # pre-normalized, so this already is the cosine similarity.
    cosine = jnp.dot(emb_ref[...], w_ref[...], preferred_element_type=jnp.float32)

    Bt, Ct = cosine.shape
    # Local target mask: compare a local iota against (tgt - j*Ct) instead of
    # adding j*Ct to the full-tile iota (saves a full-tile VPU add per step).
    local_tgt = tgt_ref[...] - j * Ct                # (Bt, 1) i32; padded rows use -1
    col = lax.broadcasted_iota(jnp.int32, (Bt, Ct), 1)
    is_target = col == local_tgt                     # (Bt, Ct) bool

    # Target-only margin math: extract the one target cosine per row via a masked
    # row-reduce (XLU), then sqrt/phi/easy-margin on the (Bt, 1) vector only.
    t_cos = jnp.sum(jnp.where(is_target, cosine, 0.0), axis=-1, keepdims=True)
    sine = jnp.sqrt(jnp.clip(1.0 - t_cos * t_cos, 0.0, 1.0))
    phi = t_cos * cos_m - sine * sin_m
    phi = jnp.where(t_cos > 0.0, phi, t_cos)         # easy-margin branch, as in the source

    logits = jnp.where(is_target, phi, cosine)       # blend only at the target column
    # NOTE: PyTorch source hard-codes `*= 64` (not self.s); reproduced via `scale`.
    out_ref[...] = (logits * scale).astype(out_ref.dtype)


def arcface_forward(embeddings, targets, w_prepped, num_classes, *,
                    m=0.5, scale=64.0, block_b=256, block_c=1024, eps=1e-12):
    """embeddings (B, E) f32, targets (B,) int, w_prepped (E, C_pad) bf16 from
    prepare_arcface_weight  ->  (B, num_classes) f32 logits."""
    B, E = embeddings.shape
    C = num_classes
    Ct, C_pad = _class_tiling(C, block_c)
    assert w_prepped.shape == (E, C_pad), (w_prepped.shape, (E, C_pad))

    Bt = min(block_b, _round_up(B, 8))
    B_pad = _round_up(B, Bt)

    # Per-call embedding prep (only B x E work): L2-normalize once in f32, cast bf16.
    emb = embeddings.astype(jnp.float32)
    emb = emb * lax.rsqrt(jnp.maximum(jnp.sum(emb * emb, axis=-1, keepdims=True),
                                      eps * eps))
    emb = emb.astype(jnp.bfloat16)
    if B_pad != B:
        emb = jnp.pad(emb, ((0, B_pad - B), (0, 0)))

    tgt = targets.astype(jnp.int32).reshape(-1, 1)
    if B_pad != B:
        tgt = jnp.pad(tgt, ((0, B_pad - B), (0, 0)), constant_values=-1)  # never matches

    n_ct = C_pad // Ct
    n_bt = B_pad // Bt
    # Grid: class tiles outer, batch tiles inner.  The weight block index is
    # invariant across the inner B sweep, so the (E, Ct) bf16 tile stays resident
    # in VMEM and only the small (Bt, E) embedding tile is re-fetched.
    grid = (n_ct, n_bt)

    kernel = functools.partial(_arcface_kernel, cos_m=math.cos(m),
                               sin_m=math.sin(m), scale=float(scale))

    # Size VMEM to the actual double-buffered working set (+ headroom) instead of
    # clamping at the physical maximum -- v7x only has 64 MiB per TC.
    tile_bytes = (Bt * E * 2) + (E * Ct * 2) + (Bt * 128 * 4) + (Bt * Ct * 4)
    vmem_limit = int(min(max(2 * tile_bytes + (4 << 20), 16 << 20), 64 << 20))

    cost = pl.CostEstimate(
        flops=int(2 * B_pad * C_pad * E),
        transcendentals=int(B_pad * n_ct),
        bytes_accessed=int(n_ct * B_pad * E * 2 +      # embeddings re-fetched per C tile
                           C_pad * E * 2 +             # weight streamed once
                           n_ct * B_pad * 4 +          # targets
                           B_pad * C_pad * 4))         # logits write

    out = pl.pallas_call(
        kernel,
        out_shape=jax.ShapeDtypeStruct((B_pad, C_pad), jnp.float32),
        grid_spec=pltpu.PrefetchScalarGridSpec(
            num_scalar_prefetch=0,
            grid=grid,
            in_specs=[
                pl.BlockSpec((Bt, E), lambda j, i: (i, 0)),   # normalized bf16 embeddings
                pl.BlockSpec((E, Ct), lambda j, i: (0, j)),   # normalized bf16 weight (E, C)
                pl.BlockSpec((Bt, 1), lambda j, i: (i, 0)),   # targets
            ],
            out_specs=pl.BlockSpec((Bt, Ct), lambda j, i: (i, j)),
        ),
        compiler_params=pltpu.CompilerParams(
            # Megacore split on the class axis (disjoint weight stream per core);
            # the inner batch axis stays sequential so the weight tile stays resident.
            dimension_semantics=("parallel", "arbitrary"),
            vmem_limit_bytes=vmem_limit),
        cost_estimate=cost,
    )(emb, w_prepped, tgt)

    return out[:B, :C]


def _reference(embeddings, targets, weight, m=0.5, scale=64.0, bf16_matmul=False):
    """Pure-JAX reference. bf16_matmul=True mirrors the kernel's numerics
    (normalize both operands in f32, cast to bf16, f32 MXU accumulation)."""
    cos_m, sin_m = math.cos(m), math.sin(m)
    eps = 1e-12
    en = embeddings * lax.rsqrt(
        jnp.maximum(jnp.sum(embeddings ** 2, axis=-1, keepdims=True), eps * eps))
    wn = weight * lax.rsqrt(
        jnp.maximum(jnp.sum(weight ** 2, axis=-1, keepdims=True), eps * eps))
    if bf16_matmul:
        cosine = jnp.dot(en.astype(jnp.bfloat16), wn.astype(jnp.bfloat16).T,
                         preferred_element_type=jnp.float32)
    else:
        cosine = jnp.dot(en, wn.T, precision=lax.Precision.HIGHEST)
    sine = jnp.sqrt(jnp.clip(1.0 - cosine ** 2, 0.0, 1.0))
    phi = cosine * cos_m - sine * sin_m
    phi = jnp.where(cosine > 0, phi, cosine)
    one_hot = jax.nn.one_hot(targets, weight.shape[0], dtype=cosine.dtype)
    return (one_hot * phi + (1.0 - one_hot) * cosine) * scale


if __name__ == "__main__":
    # Small, deterministic config matching the module defaults.
    embedding_size = 128
    num_classes = 100
    batch = 4
    m = 0.5

    key = jax.random.PRNGKey(0)
    k_emb, k_w, k_tgt = jax.random.split(key, 3)

    # Deterministic xavier_uniform_-style init for weight (C, E).
    bound = math.sqrt(6.0 / (num_classes + embedding_size))
    weight = jax.random.uniform(k_w, (num_classes, embedding_size), jnp.float32,
                                minval=-bound, maxval=bound)
    embeddings = jax.random.normal(k_emb, (batch, embedding_size), jnp.float32)
    targets = jax.random.randint(k_tgt, (batch,), 0, num_classes, jnp.int32)

    # One-time weight preprocessing (hoisted out of the per-call path).
    w_prep = jax.block_until_ready(prepare_arcface_weight(weight, block_c=1024))

    out = arcface_forward(embeddings, targets, w_prep, num_classes, m=m, scale=64.0)
    out = jax.block_until_ready(out)
    assert out.shape == (batch, num_classes)

    # Tight check vs. a kernel-consistent reference (f32-normalized, bf16 MXU inputs).
    ref_bf16 = _reference(embeddings, targets, weight, m=m, scale=64.0, bf16_matmul=True)
    max_diff = float(jnp.max(jnp.abs(out - ref_bf16)))
    assert max_diff < 5e-2, f"kernel vs bf16-consistent reference diff {max_diff}"

    # Loose check vs. full-f32 reference on off-target logits (bounded by bf16
    # rounding of the MXU inputs: <= 64 * 2^-8 ~= 0.25).
    ref_f32 = _reference(embeddings, targets, weight, m=m, scale=64.0, bf16_matmul=False)
    off_target = targets[:, None] != jnp.arange(num_classes)[None, :]
    off_diff = float(jnp.max(jnp.abs(jnp.where(off_target, out - ref_f32, 0.0))))
    assert off_diff < 0.35, f"off-target diff vs f32 reference {off_diff}"

    print("KERNEL_OK")
</pallas_src>

<mosaic_0001>
module attributes {stable_mosaic.version = 11 : i64} {
  func.func @_arcface_kernel(%arg0: i32, %arg1: i32, %arg2: memref<8x128xbf16, #tpu.memory_space<vmem>>, %arg3: memref<128x128xbf16, #tpu.memory_space<vmem>>, %arg4: memref<8x1xi32, #tpu.memory_space<vmem>>, %arg5: memref<8x128xf32, #tpu.memory_space<vmem>>) attributes {dimension_semantics = [#tpu.dimension_semantics<parallel>, #tpu.dimension_semantics<arbitrary>], iteration_bounds = array<i64: 1, 1>, scalar_prefetch = 0 : i64, scratch_operands = 0 : i64, tpu.core_type = #tpu.core_type<tc>, window_params = [{transform_indices = @transform_0, window_bounds = array<i64: 8, 128>}, {transform_indices = @transform_1, window_bounds = array<i64: 128, 128>}, {transform_indices = @transform_2, window_bounds = array<i64: 8, 1>}, {transform_indices = @transform_3, window_bounds = array<i64: 8, 128>}]} {
    %c0 = arith.constant 0 : index
    %c0_0 = arith.constant 0 : index
    %0 = vector.load %arg2[%c0, %c0_0] : memref<8x128xbf16, #tpu.memory_space<vmem>>, vector<8x128xbf16>
    %c0_1 = arith.constant 0 : index
    %c0_2 = arith.constant 0 : index
    %1 = vector.load %arg3[%c0_1, %c0_2] : memref<128x128xbf16, #tpu.memory_space<vmem>>, vector<128x128xbf16>
    %cst = arith.constant dense<0.000000e+00> : vector<8x128xf32>
    %2 = tpu.matmul %0, %1, %cst {dimension_numbers = #tpu.dot_dimension_numbers<[1], [0], [0], [1], [0, 0, 1, 1], [], []>} : vector<8x128xbf16>, vector<128x128xbf16>, vector<8x128xf32> -> vector<8x128xf32>
    %c0_3 = arith.constant 0 : index
    %c0_4 = arith.constant 0 : index
    %3 = vector.load %arg4[%c0_3, %c0_4] : memref<8x1xi32, #tpu.memory_space<vmem>>, vector<8x1xi32>
    %c128_i32 = arith.constant 128 : i32
    %4 = arith.muli %arg0, %c128_i32 : i32
    %5 = vector.broadcast %4 : i32 to vector<8x1xi32>
    %6 = arith.subi %3, %5 : vector<8x1xi32>
    %7 = tpu.iota {dimensions = array<i32: 1>} : vector<8x128xi32>
    %8 = vector.broadcast %6 : vector<8x1xi32> to vector<8x128xi32>
    %9 = arith.cmpi eq, %7, %8 : vector<8x128xi32>
    %cst_5 = arith.constant 0.000000e+00 : f32
    %10 = vector.broadcast %cst_5 : f32 to vector<8x128xf32>
    %11 = arith.select %9, %2, %10 : vector<8x128xi1>, vector<8x128xf32>
    %cst_6 = arith.constant dense<0.000000e+00> : vector<8xf32>
    %12 = vector.multi_reduction <add>, %11, %cst_6 [1] : vector<8x128xf32> to vector<8xf32>
    %13 = vector.shape_cast %12 : vector<8xf32> to vector<8x1xf32>
    %14 = arith.mulf %13, %13 : vector<8x1xf32>
    %cst_7 = arith.constant 1.000000e+00 : f32
    %15 = vector.broadcast %cst_7 : f32 to vector<8x1xf32>
    %16 = arith.subf %15, %14 : vector<8x1xf32>
    %cst_8 = arith.constant 0.000000e+00 : f32
    %cst_9 = arith.constant 1.000000e+00 : f32
    %17 = vector.broadcast %cst_8 : f32 to vector<8x1xf32>
    %18 = arith.maximumf %17, %16 : vector<8x1xf32>
    %19 = vector.broadcast %cst_9 : f32 to vector<8x1xf32>
    %20 = arith.minimumf %19, %18 : vector<8x1xf32>
    %21 = math.sqrt %20 : vector<8x1xf32>
    %cst_10 = arith.constant 0.87758255 : f32
    %22 = vector.broadcast %cst_10 : f32 to vector<8x1xf32>
    %23 = arith.mulf %13, %22 : vector<8x1xf32>
    %cst_11 = arith.constant 0.47942555 : f32
    %24 = vector.broadcast %cst_11 : f32 to vector<8x1xf32>
    %25 = arith.mulf %21, %24 : vector<8x1xf32>
    %26 = arith.subf %23, %25 : vector<8x1xf32>
    %cst_12 = arith.constant 0.000000e+00 : f32
    %27 = vector.broadcast %cst_12 : f32 to vector<8x1xf32>
    %28 = arith.cmpf ogt, %13, %27 : vector<8x1xf32>
    %29 = arith.select %28, %26, %13 : vector<8x1xi1>, vector<8x1xf32>
    %30 = vector.shape_cast %29 : vector<8x1xf32> to vector<8x1xf32>
    %31 = vector.broadcast %30 : vector<8x1xf32> to vector<8x128xf32>
    %32 = arith.select %9, %31, %2 : vector<8x128xi1>, vector<8x128xf32>
    %cst_13 = arith.constant 6.400000e+01 : f32
    %33 = vector.broadcast %cst_13 : f32 to vector<8x128xf32>
    %34 = arith.mulf %32, %33 : vector<8x128xf32>
    %c0_14 = arith.constant 0 : index
    %c0_15 = arith.constant 0 : index
    %35 = vector.load %arg5[%c0_14, %c0_15] : memref<8x128xf32, #tpu.memory_space<vmem>>, vector<8x128xf32>
    tpu.vector_store %arg5[%c0_14, %c0_15], %34 {strides = array<i32>} : memref<8x128xf32, #tpu.memory_space<vmem>>, vector<8x128xf32>,
    return
  }
  func.func @transform_0(%arg0: i32, %arg1: i32) -> (i32, i32) {
    %c0_i32 = arith.constant 0 : i32
    %c0_i32_0 = arith.constant 0 : i32
    return %arg1, %c0_i32 : i32, i32
  }
  func.func @transform_1(%arg0: i32, %arg1: i32) -> (i32, i32) {
    %c0_i32 = arith.constant 0 : i32
    %c0_i32_0 = arith.constant 0 : i32
    return %c0_i32, %arg0 : i32, i32
  }
  func.func @transform_2(%arg0: i32, %arg1: i32) -> (i32, i32) {
    %c0_i32 = arith.constant 0 : i32
    %c0_i32_0 = arith.constant 0 : i32
    return %arg1, %c0_i32 : i32, i32
  }
  func.func @transform_3(%arg0: i32, %arg1: i32) -> (i32, i32) {
    %c0_i32 = arith.constant 0 : i32
    return %arg1, %arg0 : i32, i32
  }
}

</mosaic_0001>

<llo_original>
// kernel: tpu_custom_call.1
$region0: #{tpu_custom_call.1}
  #allocation0 [shape = 'u32[]', space=smem, size = 0x4, offset = 0x4, fixed_abs, tag = 'smem constant byte address 0x4 - core index']
  #allocation1 [shape = 'u32[144,128]{1,0:T(1,128)}', space=vmem, size = 0x12000, scoped, tag = 'internal scratch']
  %s0 = inlined_call_operand.vmem [shape: bf16[8,128], index: 0, kind: input, shape index: {}]
  %s1 = inlined_call_operand.hbm [shape: bf16[128,128], index: 1, kind: input, shape index: {}]
  %s2 = inlined_call_operand.vmem [shape: s32[8,1], index: 2, kind: input, shape index: {}]
  %s3 = inlined_call_operand.hbm [shape: f32[8,128], index: 3, kind: output, shape index: {}]
  %s4 = sld [smem:[#allocation0]]
  $region26: #{tpu_custom_call.1} parent=0
    _
  %s6 = ssub.s32 1, %s4
  %s7 = scalar_select 0, %s6, %s4
  $region1: #{tpu_custom_call.1} parent=0
    #allocation2 [shape = 'u8[32768]{0}', space=vmem, size = 0x8000, scoped, tag = 'input window, operand 1, single buffered']
    #allocation3 [shape = 's32[1]{0}', space=sflag, size = 0x4, scoped, tag = 'scoped memory for tpu_custom_call.1']
    #allocation4 [shape = 's32[1]{0}', space=sflag, size = 0x4, scoped, tag = 'scoped memory for tpu_custom_call.1']
    #allocation5 [shape = 'u8[4096]{0}', space=vmem, size = 0x1000, scoped, tag = 'output window, operand 0, single buffered']
    %8 = vsyncpa [#allocation3], 0
    %9 = vsyncpa [#allocation4], 0
    // Predicated region
    $region2: #{tpu_custom_call.1} parent=1 // pred_check
      _
    $region3: #{tpu_custom_call.1} parent=1 // pred_check_branch
      %11 = sbr.rel (0) target = $region5
    $region4: #{tpu_custom_call.1} parent=1 // pred_region
      _
    $region5: #{tpu_custom_call.1} parent=1 // pred_fallthru
      _
    // Predicated region
    $region6: #{tpu_custom_call.1} parent=1 // pred_check
      _
    $region7: #{tpu_custom_call.1} parent=1 // pred_check_branch
      %13 = sbr.rel (0) target = $region9
    $region8: #{tpu_custom_call.1} parent=1 // pred_region
      %s15 = ssub.s32 1024, 1024
      %16 = vsyncadd [#allocation3], %s15
      %s17 = sshll.u32 [#allocation2], 4
      %s18 = int_to_ptr.vmem [resolvable:$true] %s17
      %23 = dma.hbm_to_vmem [thread:$0]  %s1, 1024, %s18, [#allocation3], 64, 64, 4
    $region9: #{tpu_custom_call.1} parent=1 // pred_fallthru
      _
    // Predicated region
    $region10: #{tpu_custom_call.1} parent=1 // pred_check
      _
    $region11: #{tpu_custom_call.1} parent=1 // pred_check_branch
      %25 = sbr.rel (0) target = $region13
    $region12: #{tpu_custom_call.1} parent=1 // pred_region
      _
    $region13: #{tpu_custom_call.1} parent=1 // pred_fallthru
      _
    // Predicated region
    $region14: #{tpu_custom_call.1} parent=1 // pred_check
      _
    $region15: #{tpu_custom_call.1} parent=1 // pred_check_branch
      %27 = sbr.rel (0) target = $region17
    $region16: #{tpu_custom_call.1} parent=1 // pred_region
      %28 = dma.done [#allocation3], 1024
    $region17: #{tpu_custom_call.1} parent=1 // pred_fallthru
      _
    %v30 = vld [vmem:[%s0] sm:$0xf]
    %v31 = vld [vmem:[#allocation2] sm:$0xf]
    %v32 = vld [vmem:[#allocation2 + $0x4] sm:$0xf]
    %v33 = vld [vmem:[#allocation2 + $0x8] sm:$0xf]
    %v34 = vld [vmem:[#allocation2 + $0xc] sm:$0xf]
    %v35 = vld [vmem:[#allocation2 + $0x10] sm:$0xf]
    %v36 = vld [vmem:[#allocation2 + $0x14] sm:$0xf]
    %v37 = vld [vmem:[#allocation2 + $0x18] sm:$0xf]
    %v38 = vld [vmem:[#allocation2 + $0x1c] sm:$0xf]
    %v39 = vld [vmem:[#allocation2 + $0x20] sm:$0xf]
    %v40 = vld [vmem:[#allocation2 + $0x24] sm:$0xf]
    %v41 = vld [vmem:[#allocation2 + $0x28] sm:$0xf]
    %v42 = vld [vmem:[#allocation2 + $0x2c] sm:$0xf]
    %v43 = vld [vmem:[#allocation2 + $0x30] sm:$0xf]
    %v44 = vld [vmem:[#allocation2 + $0x34] sm:$0xf]
    %v45 = vld [vmem:[#allocation2 + $0x38] sm:$0xf]
    %v46 = vld [vmem:[#allocation2 + $0x3c] sm:$0xf]
    %v63 = vunpack.c.l.b16 %v31
    %v64 = vunpack.c.l.b16 %v32
    %v65 = vunpack.c.l.b16 %v33
    %v66 = vunpack.c.l.b16 %v34
    %v67 = vunpack.c.l.b16 %v35
    %v68 = vunpack.c.l.b16 %v36
    %v69 = vunpack.c.l.b16 %v37
    %v70 = vunpack.c.l.b16 %v38
    %v71 = vunpack.c.l.b16 %v39
    %v72 = vunpack.c.l.b16 %v40
    %v73 = vunpack.c.l.b16 %v41
    %v74 = vunpack.c.l.b16 %v42
    %v75 = vunpack.c.l.b16 %v43
    %v76 = vunpack.c.l.b16 %v44
    %v77 = vunpack.c.l.b16 %v45
    %v78 = vunpack.c.l.b16 %v46
    %v79 = vpack.c.b16 %v64, %v63
    %v80 = vpack.c.b16 %v66, %v65
    %v81 = vpack.c.b16 %v68, %v67
    %v82 = vpack.c.b16 %v70, %v69
    %v83 = vpack.c.b16 %v72, %v71
    %v84 = vpack.c.b16 %v74, %v73
    %v85 = vpack.c.b16 %v76, %v75
    %v86 = vpack.c.b16 %v78, %v77
    %95 = vmatprep.subr.bf16.mxu0 0
    %96 = vmatpush1.bf16.msra.mxu0 %v79
    %97 = vmatprep.subr.bf16.mxu0 0
    %98 = vmatpush1.bf16.msra.mxu0 %v80
    %99 = vmatprep.subr.bf16.mxu0 0
    %100 = vmatpush1.bf16.msra.mxu0 %v81
    %101 = vmatprep.subr.bf16.mxu0 0
    %102 = vmatpush1.bf16.msra.mxu0 %v82
    %103 = vmatprep.subr.bf16.mxu0 0
    %104 = vmatpush1.bf16.msra.mxu0 %v83
    %105 = vmatprep.subr.bf16.mxu0 0
    %106 = vmatpush1.bf16.msra.mxu0 %v84
    %107 = vmatprep.subr.bf16.mxu0 0
    %108 = vmatpush1.bf16.msra.mxu0 %v85
    %109 = vmatprep.subr.bf16.mxu0 0
    %110 = vmatpush1.bf16.msra.mxu0 %v86
    %111 = vmatprep.subr.bf16.mxu0 0
    %112 = vmatpush1.bf16.msra.mxu0 0
    %113 = vmatprep.subr.bf16.mxu0 0
    %114 = vmatpush1.bf16.msra.mxu0 0
    %115 = vmatprep.subr.bf16.mxu0 0
    %116 = vmatpush1.bf16.msra.mxu0 0
    %117 = vmatprep.subr.bf16.mxu0 0
    %118 = vmatpush1.bf16.msra.mxu0 0
    %119 = vmatprep.subr.bf16.mxu0 0
    %120 = vmatpush1.bf16.msra.mxu0 0
    %121 = vmatprep.subr.bf16.mxu0 0
    %122 = vmatpush1.bf16.msra.mxu0 0
    %123 = vmatprep.subr.bf16.mxu0 0
    %124 = vmatpush1.bf16.msra.mxu0 0
    %125 = vmatprep.subr.bf16.mxu0 0
    %126 = vmatpush1.bf16.msra.mxu0 0
    %127 = vmatprep.mubr.bf16.mxu0 0
    %128 = vmatmul.mubr.bf16.gmra.mrb[0].mxu0 %v30
    %v129 = vpop.f32.mrb[0].mxu0
    %v130 = vadd.f32 0.0, %v129
    %v131 = vpop.f32.mrb[0].mxu0
    %v132 = vpop.f32.mrb[0].mxu0
    %v133 = vpop.f32.mrb[0].mxu0
    %134 = vdwg.mxu0
    %v135 = vld [vmem:[%s2] sm:$0xff]
    %s136 = smul.u32 0, 128
    %v137 = vstv %s136
    %v138 = vsub.s32 %v135, %v137
    %v139 = vlaneseq
    %v140 = vand.u32 %v139, 127
    %141 = vset.pattern.permute.xlu0 0
    %142 = vperm.xlu0 %141, %v138
    %v143 = vpop.permute.xlu0 %142
    %vm144 = vcmp.eq.s32.totalorder %v140, %v143
    %v145 = vsel %vm144, %v130, 0.0
    %146 = vadd.xlane.f32.xlu0 %v145
    %v147 = vpop.xlane.xlu0 %146
    %v148 = vmul.f32 %v147, %v147
    %v149 = vsub.f32 1.0, %v148
    %v150 = vmax.f32 %v149, 0.0
    %v151 = vmin.f32 %v150, 1.0
    %v152 = vrsqrt.pop %v151
    %v153 = vmul.f32 %v151, %v152
    %vm154 = vcmp.eq.f32.partialorder %v151, inf
    %v155 = vsel %vm154, %v151, %v153
    %vm156 = vcmp.eq.f32.partialorder %v151, 0.0
    %v157 = vand.u32 %v151, 2147483648
    %v158 = vsel %vm156, %v157, %v155
    %v159 = vmul.f32 %v147, 0.87758255
    %v160 = vmul.f32 %v158, 0.47942555
    %v161 = vsub.f32 %v159, %v160
    %vm162 = vcmp.gt.f32.partialorder %v147, 0.0
    %v163 = vsel %vm162, %v161, %v147
    %v164 = vsel %vm144, %v163, %v130
    %v165 = vmul.f32 %v164, 64.0
    %166 = vst [vmem:[#allocation5] sm:$0xff] %v165
    // Predicated region
    $region18: #{tpu_custom_call.1} parent=1 // pred_check
      _
    $region19: #{tpu_custom_call.1} parent=1 // pred_check_branch
      %168 = sbr.rel (0) target = $region21
    $region20: #{tpu_custom_call.1} parent=1 // pred_region
      %s170 = ssub.s32 128, 128
      %171 = vsyncadd [#allocation4], %s170
      %s173 = sshll.u32 [#allocation5], 4
      %s174 = int_to_ptr.vmem [resolvable:$true] %s173
      %176 = dma.vmem_to_hbm [thread:$0]  %s174, 128, %s3, [#allocation4]
    $region21: #{tpu_custom_call.1} parent=1 // pred_fallthru
      _
    // Predicated region
    $region22: #{tpu_custom_call.1} parent=1 // pred_check
      _
    $region23: #{tpu_custom_call.1} parent=1 // pred_check_branch
      %178 = sbr.rel (0) target = $region25
    $region24: #{tpu_custom_call.1} parent=1 // pred_region
      %179 = dma.done [#allocation4], 128
    $region25: #{tpu_custom_call.1} parent=1 // pred_fallthru
      _
    %180 = vsyncpa [#allocation3], 1
    %181 = vsyncpa [#allocation4], 1

</llo_original>
